<compile_context>
chip_gen: v6e
topology: v6e:2x2x1
jax: 0.10.0
libtpu: 0.0.40
codegen_flags: <defaults>
</compile_context>

<pallas_src>
import numpy as np

import jax
import jax.numpy as jnp
from jax.experimental import pallas as pl
from jax.experimental.pallas import tpu as pltpu


def _en_blocks_kernel(xp_ref, w1_ref, b1_ref, w2_ref, b2_ref, out_ref,
                      c1p_ref):
    # xp_ref : (1, H+2, W*Cin)   f32   H-padded, lane-packed input
    # w1_ref : (3, W*Cin, W*Cout) bf16 block-Toeplitz conv1 weights (BN1 folded)
    # b1_ref : (1, W*Cout)        f32  folded BN1 bias, tiled over W
    # w2_ref : (3, W*Cout, W*Cout) bf16
    # b2_ref : (1, W*Cout)        f32
    # out_ref: (1, H, W*Cout)     f32
    # c1p_ref: (H+2, W*Cout)      f32  VMEM scratch (H-padded conv1 output)
    H, WC = out_ref.shape[1], out_ref.shape[2]
    bf16 = jnp.bfloat16

    xp = xp_ref[0]                                          # (H+2, W*Cin)

    # ---- conv1 (+ folded BN1; Dropout = identity in eval) + ReLU ----------
    acc1 = jnp.dot(xp[0:H].astype(bf16), w1_ref[0],
                   preferred_element_type=jnp.float32)
    acc1 = acc1 + jnp.dot(xp[1:H + 1].astype(bf16), w1_ref[1],
                          preferred_element_type=jnp.float32)
    acc1 = acc1 + jnp.dot(xp[2:H + 2].astype(bf16), w1_ref[2],
                          preferred_element_type=jnp.float32)
    c1 = jnp.maximum(acc1 + b1_ref[...], 0.0)               # (H, WC) lane-dense

    # ---- H-halo zero padding of c1 via persistent VMEM scratch ------------
    zrow = jnp.zeros((1, WC), jnp.float32)
    c1p_ref[0:1, :] = zrow
    c1p_ref[H + 1:H + 2, :] = zrow
    c1p_ref[1:H + 1, :] = c1

    c1p = c1p_ref[...]                                      # (H+2, WC)

    # ---- conv2 (+ folded BN2) + ReLU --------------------------------------
    acc2 = jnp.dot(c1p[0:H].astype(bf16), w2_ref[0],
                   preferred_element_type=jnp.float32)
    acc2 = acc2 + jnp.dot(c1p[1:H + 1].astype(bf16), w2_ref[1],
                          preferred_element_type=jnp.float32)
    acc2 = acc2 + jnp.dot(c1p[2:H + 2].astype(bf16), w2_ref[2],
                          preferred_element_type=jnp.float32)
    c2 = jnp.maximum(acc2 + b2_ref[...], 0.0)

    # ---- residual sum: full-width (128-lane) unmasked store ---------------
    out_ref[0] = c1 + c2


def en_blocks_pallas(x_nhwc, w1_t, b1_t, w2_t, b2_t):
    N, H, W, Cin = x_nhwc.shape
    WC = b1_t.shape[1]                  # W * Cout
    Cout = WC // W

    # pad H only (W padding is baked into the Toeplitz weights) and pack
    # (W, Cin) into the lane dimension -> lane-dense activations everywhere.
    xp = jnp.pad(x_nhwc, ((0, 0), (1, 1), (0, 0), (0, 0)))
    xp = xp.reshape(N, H + 2, W * Cin).astype(jnp.float32)

    out = pl.pallas_call(
        _en_blocks_kernel,
        out_shape=jax.ShapeDtypeStruct((N, H, WC), jnp.float32),
        grid_spec=pltpu.PrefetchScalarGridSpec(
            num_scalar_prefetch=0,
            grid=(N,),
            in_specs=[
                pl.BlockSpec((1, H + 2, W * Cin), lambda n: (n, 0, 0)),
                pl.BlockSpec((3, W * Cin, WC), lambda n: (0, 0, 0)),
                pl.BlockSpec((1, WC), lambda n: (0, 0)),
                pl.BlockSpec((3, WC, WC), lambda n: (0, 0, 0)),
                pl.BlockSpec((1, WC), lambda n: (0, 0)),
            ],
            out_specs=pl.BlockSpec((1, H, WC), lambda n: (n, 0, 0)),
            scratch_shapes=[pltpu.VMEM((H + 2, WC), jnp.float32)],
        ),
        compiler_params=pltpu.CompilerParams(
            dimension_semantics=("parallel",)),
    )(xp, w1_t, b1_t, w2_t, b2_t)

    # unpack lanes back to NHWC (contiguous reshape, free)
    return out.reshape(N, H, W, Cout)


def _fold_bn(conv_b, gamma, beta, mean, var, eps=1e-5):
    s = gamma / jnp.sqrt(var + eps)               # scale -> folded into weights
    b = (conv_b - mean) * s + beta                # bias  -> kept in kernel
    return s, b


def _toeplitz_weights(w_oihw, bn_scale, W):
    """(Cout, Cin, 3, 3) conv weight (BN scale folded) -> (3, W*Cin, W*Cout)
    block-Toeplitz matrices, one per kernel row kh.  Zero-padding along W is
    realised by clipping the band at the matrix edges."""
    w = np.asarray(w_oihw, np.float32) * \
        np.asarray(bn_scale, np.float32)[:, None, None, None]
    Cout, Cin = w.shape[0], w.shape[1]
    B = np.zeros((3, W * Cin, W * Cout), np.float32)
    for kh in range(3):
        for kw in range(3):
            blk = w[:, :, kh, kw].T               # (Cin, Cout)
            for wo in range(W):
                wi = wo + kw - 1
                if 0 <= wi < W:
                    B[kh, wi * Cin:(wi + 1) * Cin,
                      wo * Cout:(wo + 1) * Cout] = blk
    return jnp.asarray(B)


def _reference_nchw(x, p):
    # plain-JAX replica of the PyTorch eval-mode forward, for verification
    def block(x, w, b, g, be, m, v):
        y = jax.lax.conv_general_dilated(
            x, w, window_strides=(1, 1), padding=((1, 1), (1, 1)),
            dimension_numbers=('NCHW', 'OIHW', 'NCHW'))
        y = y + b[None, :, None, None]
        y = (y - m[None, :, None, None]) / jnp.sqrt(v[None, :, None, None] + 1e-5)
        y = y * g[None, :, None, None] + be[None, :, None, None]
        return jnp.maximum(y, 0.0)
    c1 = block(x, p['w1'], p['b1'], p['g1'], p['be1'], p['m1'], p['v1'])
    c2 = block(c1, p['w2'], p['b2'], p['g2'], p['be2'], p['m2'], p['v2'])
    return c1 + c2


if __name__ == "__main__":
    key = jax.random.PRNGKey(0)
    N, Cin, Cout, H, W = 2, 4, 8, 16, 16          # W * Cout = 128 (lane-dense)

    ks = jax.random.split(key, 9)
    params = {
        'w1': 0.1 * jax.random.normal(ks[0], (Cout, Cin, 3, 3), jnp.float32),
        'b1': 0.05 * jax.random.normal(ks[1], (Cout,), jnp.float32),
        'g1': 1.0 + 0.1 * jax.random.normal(ks[2], (Cout,), jnp.float32),
        'be1': 0.05 * jax.random.normal(ks[3], (Cout,), jnp.float32),
        'm1': 0.1 * jnp.arange(Cout, dtype=jnp.float32),
        'v1': 1.0 + 0.05 * jnp.arange(Cout, dtype=jnp.float32),
        'w2': 0.1 * jax.random.normal(ks[4], (Cout, Cout, 3, 3), jnp.float32),
        'b2': 0.05 * jax.random.normal(ks[5], (Cout,), jnp.float32),
        'g2': 1.0 + 0.1 * jax.random.normal(ks[6], (Cout,), jnp.float32),
        'be2': 0.05 * jax.random.normal(ks[7], (Cout,), jnp.float32),
        'm2': 0.05 * jnp.arange(Cout, dtype=jnp.float32),
        'v2': 1.0 + 0.03 * jnp.arange(Cout, dtype=jnp.float32),
    }

    x_nchw = jax.random.normal(ks[8], (N, Cin, H, W), jnp.float32)
    x_nhwc = jnp.transpose(x_nchw, (0, 2, 3, 1))

    # fold eval-mode BN into per-channel scale (-> weights) and bias
    s1, fb1 = _fold_bn(params['b1'], params['g1'], params['be1'],
                       params['m1'], params['v1'])
    s2, fb2 = _fold_bn(params['b2'], params['g2'], params['be2'],
                       params['m2'], params['v2'])

    w1_t = _toeplitz_weights(params['w1'], s1, W).astype(jnp.bfloat16)
    w2_t = _toeplitz_weights(params['w2'], s2, W).astype(jnp.bfloat16)
    b1_t = jnp.tile(fb1, W).reshape(1, W * Cout).astype(jnp.float32)
    b2_t = jnp.tile(fb2, W).reshape(1, W * Cout).astype(jnp.float32)

    out_nhwc = en_blocks_pallas(x_nhwc, w1_t, b1_t, w2_t, b2_t)
    out_nhwc = jax.block_until_ready(out_nhwc)
    out_nchw = jnp.transpose(out_nhwc, (0, 3, 1, 2))

    ref = _reference_nchw(x_nchw, params)
    max_err = jnp.max(jnp.abs(out_nchw - ref))
    # bf16 MXU operands vs. f32 reference -> relaxed tolerance
    assert jnp.allclose(out_nchw, ref, rtol=5e-2, atol=5e-2), \
        f"max abs err {max_err}"

    print("KERNEL_OK")
</pallas_src>

<mosaic_0001>
module attributes {stable_mosaic.version = 11 : i64} {
  func.func @_en_blocks_kernel(%arg0: i32, %arg1: memref<1x18x64xf32, #tpu.memory_space<vmem>>, %arg2: memref<3x64x128xbf16, #tpu.memory_space<vmem>>, %arg3: memref<1x128xf32, #tpu.memory_space<vmem>>, %arg4: memref<3x128x128xbf16, #tpu.memory_space<vmem>>, %arg5: memref<1x128xf32, #tpu.memory_space<vmem>>, %arg6: memref<1x16x128xf32, #tpu.memory_space<vmem>>, %arg7: memref<18x128xf32, #tpu.memory_space<vmem>>) attributes {dimension_semantics = [#tpu.dimension_semantics<parallel>], iteration_bounds = array<i64: 2>, scalar_prefetch = 0 : i64, scratch_operands = 1 : i64, tpu.core_type = #tpu.core_type<tc>, window_params = [{transform_indices = @transform_0, window_bounds = array<i64: 1, 18, 64>}, {pipeline_mode = #tpu.pipeline_mode<synchronous>, transform_indices = @transform_1, window_bounds = array<i64: 3, 64, 128>}, {pipeline_mode = #tpu.pipeline_mode<synchronous>, transform_indices = @transform_2, window_bounds = array<i64: 1, 128>}, {pipeline_mode = #tpu.pipeline_mode<synchronous>, transform_indices = @transform_3, window_bounds = array<i64: 3, 128, 128>}, {pipeline_mode = #tpu.pipeline_mode<synchronous>, transform_indices = @transform_4, window_bounds = array<i64: 1, 128>}, {transform_indices = @transform_5, window_bounds = array<i64: 1, 16, 128>}]} {
    %c0 = arith.constant 0 : index
    %c0_0 = arith.constant 0 : index
    %c0_1 = arith.constant 0 : index
    %0 = vector.load %arg1[%c0, %c0_0, %c0_1] : memref<1x18x64xf32, #tpu.memory_space<vmem>>, vector<1x18x64xf32>
    %1 = vector.shape_cast %0 : vector<1x18x64xf32> to vector<18x64xf32>
    %2 = vector.extract_strided_slice %1 {offsets = [0, 0], sizes = [16, 64], strides = [1, 1]} : vector<18x64xf32> to vector<16x64xf32>
    %3 = arith.truncf %2 : vector<16x64xf32> to vector<16x64xbf16>
    %c0_2 = arith.constant 0 : index
    %c0_3 = arith.constant 0 : index
    %c0_4 = arith.constant 0 : index
    %4 = vector.load %arg2[%c0_2, %c0_3, %c0_4] : memref<3x64x128xbf16, #tpu.memory_space<vmem>>, vector<1x64x128xbf16>
    %5 = vector.shape_cast %4 : vector<1x64x128xbf16> to vector<64x128xbf16>
    %cst = arith.constant dense<0.000000e+00> : vector<16x128xf32>
    %6 = tpu.matmul %3, %5, %cst {dimension_numbers = #tpu.dot_dimension_numbers<[1], [0], [0], [1], [0, 0, 1, 1], [], []>} : vector<16x64xbf16>, vector<64x128xbf16>, vector<16x128xf32> -> vector<16x128xf32>
    %7 = vector.extract_strided_slice %1 {offsets = [1, 0], sizes = [16, 64], strides = [1, 1]} : vector<18x64xf32> to vector<16x64xf32>
    %8 = arith.truncf %7 : vector<16x64xf32> to vector<16x64xbf16>
    %c1 = arith.constant 1 : index
    %c0_5 = arith.constant 0 : index
    %c0_6 = arith.constant 0 : index
    %9 = vector.load %arg2[%c1, %c0_5, %c0_6] : memref<3x64x128xbf16, #tpu.memory_space<vmem>>, vector<1x64x128xbf16>
    %10 = vector.shape_cast %9 : vector<1x64x128xbf16> to vector<64x128xbf16>
    %cst_7 = arith.constant dense<0.000000e+00> : vector<16x128xf32>
    %11 = tpu.matmul %8, %10, %cst_7 {dimension_numbers = #tpu.dot_dimension_numbers<[1], [0], [0], [1], [0, 0, 1, 1], [], []>} : vector<16x64xbf16>, vector<64x128xbf16>, vector<16x128xf32> -> vector<16x128xf32>
    %12 = arith.addf %6, %11 : vector<16x128xf32>
    %13 = vector.extract_strided_slice %1 {offsets = [2, 0], sizes = [16, 64], strides = [1, 1]} : vector<18x64xf32> to vector<16x64xf32>
    %14 = arith.truncf %13 : vector<16x64xf32> to vector<16x64xbf16>
    %c2 = arith.constant 2 : index
    %c0_8 = arith.constant 0 : index
    %c0_9 = arith.constant 0 : index
    %15 = vector.load %arg2[%c2, %c0_8, %c0_9] : memref<3x64x128xbf16, #tpu.memory_space<vmem>>, vector<1x64x128xbf16>
    %16 = vector.shape_cast %15 : vector<1x64x128xbf16> to vector<64x128xbf16>
    %cst_10 = arith.constant dense<0.000000e+00> : vector<16x128xf32>
    %17 = tpu.matmul %14, %16, %cst_10 {dimension_numbers = #tpu.dot_dimension_numbers<[1], [0], [0], [1], [0, 0, 1, 1], [], []>} : vector<16x64xbf16>, vector<64x128xbf16>, vector<16x128xf32> -> vector<16x128xf32>
    %18 = arith.addf %12, %17 : vector<16x128xf32>
    %c0_11 = arith.constant 0 : index
    %c0_12 = arith.constant 0 : index
    %19 = vector.load %arg3[%c0_11, %c0_12] : memref<1x128xf32, #tpu.memory_space<vmem>>, vector<1x128xf32>
    %20 = vector.broadcast %19 : vector<1x128xf32> to vector<16x128xf32>
    %21 = arith.addf %18, %20 : vector<16x128xf32>
    %cst_13 = arith.constant 0.000000e+00 : f32
    %22 = vector.broadcast %cst_13 : f32 to vector<16x128xf32>
    %23 = arith.maximumf %21, %22 : vector<16x128xf32>
    %cst_14 = arith.constant 0.000000e+00 : f32
    %24 = vector.broadcast %cst_14 : f32 to vector<1x128xf32>
    %c0_15 = arith.constant 0 : index
    %c0_16 = arith.constant 0 : index
    %25 = vector.load %arg7[%c0_15, %c0_16] : memref<18x128xf32, #tpu.memory_space<vmem>>, vector<1x128xf32>
    tpu.vector_store %arg7[%c0_15, %c0_16], %24 {strides = array<i32>} : memref<18x128xf32, #tpu.memory_space<vmem>>, vector<1x128xf32>,
    %c17 = arith.constant 17 : index
    %c0_17 = arith.constant 0 : index
    %26 = vector.load %arg7[%c17, %c0_17] : memref<18x128xf32, #tpu.memory_space<vmem>>, vector<1x128xf32>
    tpu.vector_store %arg7[%c17, %c0_17], %24 {strides = array<i32>} : memref<18x128xf32, #tpu.memory_space<vmem>>, vector<1x128xf32>,
    %c1_18 = arith.constant 1 : index
    %c0_19 = arith.constant 0 : index
    %27 = vector.load %arg7[%c1_18, %c0_19] : memref<18x128xf32, #tpu.memory_space<vmem>>, vector<16x128xf32>
    tpu.vector_store %arg7[%c1_18, %c0_19], %23 {strides = array<i32>} : memref<18x128xf32, #tpu.memory_space<vmem>>, vector<16x128xf32>,
    %c0_20 = arith.constant 0 : index
    %c0_21 = arith.constant 0 : index
    %28 = vector.load %arg7[%c0_20, %c0_21] : memref<18x128xf32, #tpu.memory_space<vmem>>, vector<18x128xf32>
    %29 = vector.extract_strided_slice %28 {offsets = [0, 0], sizes = [16, 128], strides = [1, 1]} : vector<18x128xf32> to vector<16x128xf32>
    %30 = arith.truncf %29 : vector<16x128xf32> to vector<16x128xbf16>
    %c0_22 = arith.constant 0 : index
    %c0_23 = arith.constant 0 : index
    %c0_24 = arith.constant 0 : index
    %31 = vector.load %arg4[%c0_22, %c0_23, %c0_24] : memref<3x128x128xbf16, #tpu.memory_space<vmem>>, vector<1x128x128xbf16>
    %32 = vector.shape_cast %31 : vector<1x128x128xbf16> to vector<128x128xbf16>
    %cst_25 = arith.constant dense<0.000000e+00> : vector<16x128xf32>
    %33 = tpu.matmul %30, %32, %cst_25 {dimension_numbers = #tpu.dot_dimension_numbers<[1], [0], [0], [1], [0, 0, 1, 1], [], []>} : vector<16x128xbf16>, vector<128x128xbf16>, vector<16x128xf32> -> vector<16x128xf32>
    %34 = vector.extract_strided_slice %28 {offsets = [1, 0], sizes = [16, 128], strides = [1, 1]} : vector<18x128xf32> to vector<16x128xf32>
    %35 = arith.truncf %34 : vector<16x128xf32> to vector<16x128xbf16>
    %c1_26 = arith.constant 1 : index
    %c0_27 = arith.constant 0 : index
    %c0_28 = arith.constant 0 : index
    %36 = vector.load %arg4[%c1_26, %c0_27, %c0_28] : memref<3x128x128xbf16, #tpu.memory_space<vmem>>, vector<1x128x128xbf16>
    %37 = vector.shape_cast %36 : vector<1x128x128xbf16> to vector<128x128xbf16>
    %cst_29 = arith.constant dense<0.000000e+00> : vector<16x128xf32>
    %38 = tpu.matmul %35, %37, %cst_29 {dimension_numbers = #tpu.dot_dimension_numbers<[1], [0], [0], [1], [0, 0, 1, 1], [], []>} : vector<16x128xbf16>, vector<128x128xbf16>, vector<16x128xf32> -> vector<16x128xf32>
    %39 = arith.addf %33, %38 : vector<16x128xf32>
    %40 = vector.extract_strided_slice %28 {offsets = [2, 0], sizes = [16, 128], strides = [1, 1]} : vector<18x128xf32> to vector<16x128xf32>
    %41 = arith.truncf %40 : vector<16x128xf32> to vector<16x128xbf16>
    %c2_30 = arith.constant 2 : index
    %c0_31 = arith.constant 0 : index
    %c0_32 = arith.constant 0 : index
    %42 = vector.load %arg4[%c2_30, %c0_31, %c0_32] : memref<3x128x128xbf16, #tpu.memory_space<vmem>>, vector<1x128x128xbf16>
    %43 = vector.shape_cast %42 : vector<1x128x128xbf16> to vector<128x128xbf16>
    %cst_33 = arith.constant dense<0.000000e+00> : vector<16x128xf32>
    %44 = tpu.matmul %41, %43, %cst_33 {dimension_numbers = #tpu.dot_dimension_numbers<[1], [0], [0], [1], [0, 0, 1, 1], [], []>} : vector<16x128xbf16>, vector<128x128xbf16>, vector<16x128xf32> -> vector<16x128xf32>
    %45 = arith.addf %39, %44 : vector<16x128xf32>
    %c0_34 = arith.constant 0 : index
    %c0_35 = arith.constant 0 : index
    %46 = vector.load %arg5[%c0_34, %c0_35] : memref<1x128xf32, #tpu.memory_space<vmem>>, vector<1x128xf32>
    %47 = vector.broadcast %46 : vector<1x128xf32> to vector<16x128xf32>
    %48 = arith.addf %45, %47 : vector<16x128xf32>
    %cst_36 = arith.constant 0.000000e+00 : f32
    %49 = vector.broadcast %cst_36 : f32 to vector<16x128xf32>
    %50 = arith.maximumf %48, %49 : vector<16x128xf32>
    %51 = arith.addf %23, %50 : vector<16x128xf32>
    %c0_37 = arith.constant 0 : index
    %c0_38 = arith.constant 0 : index
    %c0_39 = arith.constant 0 : index
    %52 = vector.load %arg6[%c0_37, %c0_38, %c0_39] : memref<1x16x128xf32, #tpu.memory_space<vmem>>, vector<1x16x128xf32>
    %53 = vector.shape_cast %52 : vector<1x16x128xf32> to vector<16x128xf32>
    %54 = vector.shape_cast %51 : vector<16x128xf32> to vector<1x16x128xf32>
    tpu.vector_store %arg6[%c0_37, %c0_38, %c0_39], %54 {strides = array<i32>} : memref<1x16x128xf32, #tpu.memory_space<vmem>>, vector<1x16x128xf32>,
    return
  }
  func.func @transform_0(%arg0: i32) -> (i32, i32, i32) {
    %c0_i32 = arith.constant 0 : i32
    %c0_i32_0 = arith.constant 0 : i32
    %c0_i32_1 = arith.constant 0 : i32
    return %arg0, %c0_i32, %c0_i32_0 : i32, i32, i32
  }
  func.func @transform_1(%arg0: i32) -> (i32, i32, i32) {
    %c0_i32 = arith.constant 0 : i32
    %c0_i32_0 = arith.constant 0 : i32
    %c0_i32_1 = arith.constant 0 : i32
    %c0_i32_2 = arith.constant 0 : i32
    return %c0_i32, %c0_i32_0, %c0_i32_1 : i32, i32, i32
  }
  func.func @transform_2(%arg0: i32) -> (i32, i32) {
    %c0_i32 = arith.constant 0 : i32
    %c0_i32_0 = arith.constant 0 : i32
    %c0_i32_1 = arith.constant 0 : i32
    return %c0_i32, %c0_i32_0 : i32, i32
  }
  func.func @transform_3(%arg0: i32) -> (i32, i32, i32) {
    %c0_i32 = arith.constant 0 : i32
    %c0_i32_0 = arith.constant 0 : i32
    %c0_i32_1 = arith.constant 0 : i32
    %c0_i32_2 = arith.constant 0 : i32
    return %c0_i32, %c0_i32_0, %c0_i32_1 : i32, i32, i32
  }
  func.func @transform_4(%arg0: i32) -> (i32, i32) {
    %c0_i32 = arith.constant 0 : i32
    %c0_i32_0 = arith.constant 0 : i32
    %c0_i32_1 = arith.constant 0 : i32
    return %c0_i32, %c0_i32_0 : i32, i32
  }
  func.func @transform_5(%arg0: i32) -> (i32, i32, i32) {
    %c0_i32 = arith.constant 0 : i32
    %c0_i32_0 = arith.constant 0 : i32
    %c0_i32_1 = arith.constant 0 : i32
    return %arg0, %c0_i32, %c0_i32_0 : i32, i32, i32
  }
}

</mosaic_0001>

<llo_original>
// kernel: tpu_custom_call.1
$region0: #{tpu_custom_call.1}
  #allocation0 [shape = 'u32[]', space=smem, size = 0x4, offset = 0x4, fixed_abs, tag = 'smem constant byte address 0x4 - core index']
  #allocation1 [shape = 'u32[144,128]{1,0:T(1,128)}', space=vmem, size = 0x12000, scoped, tag = 'internal scratch']
  #allocation2 [shape = 'f32[18,128]{1,0:T(8,128)}', space=vmem, size = 0x3000, scoped, tag = 'scratch operand']
  %s0 = inlined_call_operand.vmem [shape: f32[2,18,64], index: 0, kind: input, shape index: {}]
  %s1 = inlined_call_operand.hbm [shape: bf16[3,64,128], index: 1, kind: input, shape index: {}]
  %s2 = inlined_call_operand.vmem [shape: f32[1,128], index: 2, kind: input, shape index: {}]
  %s3 = inlined_call_operand.hbm [shape: bf16[3,128,128], index: 3, kind: input, shape index: {}]
  %s4 = inlined_call_operand.vmem [shape: f32[1,128], index: 4, kind: input, shape index: {}]
  %s5 = inlined_call_operand.hbm [shape: f32[2,16,128], index: 5, kind: output, shape index: {}]
  %s6 = sld [smem:[#allocation0]]
  $region61: #{tpu_custom_call.1} parent=0
    _
  %s8 = ssub.s32 1, %s6
  %s9 = scalar_select 0, %s8, %s6
  $region1: #{tpu_custom_call.1} parent=0
    #allocation3 [shape = 'u8[49152]{0}', space=vmem, size = 0xc000, scoped, tag = 'input window, operand 1, single buffered']
    #allocation4 [shape = 's32[2]{0}', space=sflag, size = 0x8, scoped, tag = 'scoped memory for tpu_custom_call.1']
    #allocation5 [shape = 's32[2]{0}', space=sflag, size = 0x8, scoped, tag = 'scoped memory for tpu_custom_call.1']
    #allocation6 [shape = 'u8[98304]{0}', space=vmem, size = 0x18000, scoped, tag = 'input window, operand 3, single buffered']
    #allocation7 [shape = 's32[1]{0}', space=sflag, size = 0x4, scoped, tag = 'scoped memory for tpu_custom_call.1']
    #allocation8 [shape = 'u8[16384]{0}', space=vmem, size = 0x4000, scoped, tag = 'output window, operand 0']
    %10 = vsyncpa [#allocation4], 0
    %11 = vsyncpa [#allocation7], 0
    %12 = vsyncpa [#allocation5], 0
    %s13 = scalar_lea.sflag [#allocation5], 1
    %14 = vsyncpa %s13, 0
    loop: start=0, step=1, limit=4
    $region2: #{tpu_custom_call.1} parent=1 // loop_pre_header
      _
    $region3: #{tpu_custom_call.1} parent=1 // loop_header
      %s16 = sphi 0, %s20
      %p17 = scmp.ge.s32.totalorder %s16, 4
      %s26 = sphi 0, %s28
      %s29 = sphi 0, %s26
      %s30 = sphi 0, %s29
      %s46 = sphi 0, %s30
      %s50 = sphi 0, %s50
      %s52 = sphi 0, %s50
      %s53 = sphi 0, %s52
      %s67 = sphi 0, %s53
      %s71 = sphi 0, %s71
      %s73 = sphi 0, %s71
      %s74 = sphi 0, %s73
      %s88 = sphi 0, %s74
      %s92 = sphi 0, %s92
      %s94 = sphi 0, %s92
      %s95 = sphi 0, %s94
      %s109 = sphi 0, %s95
      %s113 = sphi 0, %s113
      %s115 = sphi 0, %s113
      %s116 = sphi 0, %s115
      %s130 = sphi 0, %s116
      %s136 = sphi 0, %s138
      %s139 = sphi 0, %s136
      %s140 = sphi 0, %s139
      %s156 = sphi 0, %s140
    $region4: #{tpu_custom_call.1} parent=1 // loop_header_branch
      %19 = sbr.rel (%p17) target = $region8
    $region5: #{tpu_custom_call.1} parent=1 // loop_body
      %s21 = ssub.s32 %s16, 1
      %s22 = ssub.s32 %s16, 2
      %s23 = sadd.s32 %s16, 1
      %s24 = ssub.s32 %s16, %s23
      %p25 = scmp.eq.s32.totalorder %s24, 0
      %s27 = sadd.s32 %s26, 1
      %s28 = scalar_select %p25, %s26, %s27
      %p31 = pneg %p25
      %p32 = scmp.eq.s32.totalorder %s16, 1
      %p33 = por %p31, %p32
      %p34 = scmp.ne.s32.totalorder %s26, %s29
      %p35 = scmp.eq.s32.totalorder %s16, 0
      %p36 = por %p34, %p35
      %p37 = scmp.ne.s32.totalorder %s26, %s29
      %p38 = scmp.eq.s32.totalorder %s21, 1
      %p39 = por %p37, %p38
      %p40 = scmp.ne.s32.totalorder %s29, %s30
      %p41 = scmp.eq.s32.totalorder %s21, 0
      %p42 = por %p40, %p41
      %p43 = scmp.ne.s32.totalorder %s29, %s30
      %p44 = scmp.eq.s32.totalorder %s22, 1
      %p45 = por %p43, %p44
      %p47 = scmp.ne.s32.totalorder %s30, %s46
      %p48 = scmp.eq.s32.totalorder %s22, 0
      %p49 = por %p47, %p48
      %s51 = sadd.s32 %s50, 1
      %p54 = scmp.eq.s32.totalorder %s16, 1
      %p55 = scmp.ne.s32.totalorder %s50, %s52
      %p56 = scmp.eq.s32.totalorder %s16, 0
      %p57 = por %p55, %p56
      %p58 = scmp.ne.s32.totalorder %s50, %s52
      %p59 = scmp.eq.s32.totalorder %s21, 1
      %p60 = por %p58, %p59
      %p61 = scmp.ne.s32.totalorder %s52, %s53
      %p62 = scmp.eq.s32.totalorder %s21, 0
      %p63 = por %p61, %p62
      %p64 = scmp.ne.s32.totalorder %s52, %s53
      %p65 = scmp.eq.s32.totalorder %s22, 1
      %p66 = por %p64, %p65
      %p68 = scmp.ne.s32.totalorder %s53, %s67
      %p69 = scmp.eq.s32.totalorder %s22, 0
      %p70 = por %p68, %p69
      %s72 = sadd.s32 %s71, 1
      %p75 = scmp.eq.s32.totalorder %s16, 1
      %p76 = scmp.ne.s32.totalorder %s71, %s73
      %p77 = scmp.eq.s32.totalorder %s16, 0
      %p78 = por %p76, %p77
      %p79 = scmp.ne.s32.totalorder %s71, %s73
      %p80 = scmp.eq.s32.totalorder %s21, 1
      %p81 = por %p79, %p80
      %p82 = scmp.ne.s32.totalorder %s73, %s74
      %p83 = scmp.eq.s32.totalorder %s21, 0
      %p84 = por %p82, %p83
      %p85 = scmp.ne.s32.totalorder %s73, %s74
      %p86 = scmp.eq.s32.totalorder %s22, 1
      %p87 = por %p85, %p86
      %p89 = scmp.ne.s32.totalorder %s74, %s88
      %p90 = scmp.eq.s32.totalorder %s22, 0
      %p91 = por %p89, %p90
      %s93 = sadd.s32 %s92, 1
      %p96 = scmp.eq.s32.totalorder %s16, 1
      %p97 = scmp.ne.s32.totalorder %s92, %s94
      %p98 = scmp.eq.s32.totalorder %s16, 0
      %p99 = por %p97, %p98
      %p100 = scmp.ne.s32.totalorder %s92, %s94
      %p101 = scmp.eq.s32.totalorder %s21, 1
      %p102 = por %p100, %p101
      %p103 = scmp.ne.s32.totalorder %s94, %s95
      %p104 = scmp.eq.s32.totalorder %s21, 0
      %p105 = por %p103, %p104
      %p106 = scmp.ne.s32.totalorder %s94, %s95
      %p107 = scmp.eq.s32.totalorder %s22, 1
      %p108 = por %p106, %p107
      %p110 = scmp.ne.s32.totalorder %s95, %s109
      %p111 = scmp.eq.s32.totalorder %s22, 0
      %p112 = por %p110, %p111
      %s114 = sadd.s32 %s113, 1
      %p117 = scmp.eq.s32.totalorder %s16, 1
      %p118 = scmp.ne.s32.totalorder %s113, %s115
      %p119 = scmp.eq.s32.totalorder %s16, 0
      %p120 = por %p118, %p119
      %p121 = scmp.ne.s32.totalorder %s113, %s115
      %p122 = scmp.eq.s32.totalorder %s21, 1
      %p123 = por %p121, %p122
      %p124 = scmp.ne.s32.totalorder %s115, %s116
      %p125 = scmp.eq.s32.totalorder %s21, 0
      %p126 = por %p124, %p125
      %p127 = scmp.ne.s32.totalorder %s115, %s116
      %p128 = scmp.eq.s32.totalorder %s22, 1
      %p129 = por %p127, %p128
      %p131 = scmp.ne.s32.totalorder %s116, %s130
      %p132 = scmp.eq.s32.totalorder %s22, 0
      %p133 = por %p131, %p132
      %s134 = ssub.s32 %s16, %s23
      %p135 = scmp.eq.s32.totalorder %s134, 0
      %s137 = sadd.s32 %s136, 1
      %s138 = scalar_select %p135, %s136, %s137
      %p141 = pneg %p135
      %p142 = scmp.eq.s32.totalorder %s16, 1
      %p143 = por %p141, %p142
      %p144 = scmp.ne.s32.totalorder %s136, %s139
      %p145 = scmp.eq.s32.totalorder %s16, 0
      %p146 = por %p144, %p145
      %p147 = scmp.ne.s32.totalorder %s136, %s139
      %p148 = scmp.eq.s32.totalorder %s21, 1
      %p149 = por %p147, %p148
      %p150 = scmp.ne.s32.totalorder %s139, %s140
      %p151 = scmp.eq.s32.totalorder %s21, 0
      %p152 = por %p150, %p151
      %p153 = scmp.ne.s32.totalorder %s139, %s140
      %p154 = scmp.eq.s32.totalorder %s22, 1
      %p155 = por %p153, %p154
      %p157 = scmp.ne.s32.totalorder %s140, %s156
      %p158 = scmp.eq.s32.totalorder %s22, 0
      %p159 = por %p157, %p158
      %p160 = scmp.le.s32.totalorder 1, %s16
      %p161 = scmp.lt.s32.totalorder %s16, 3
      %p162 = pnand %p160, %p161
      %p163 = pneg %p162
      // Predicated region
      $region9: #{tpu_custom_call.1} parent=5 // pred_check
        _
      $region10: #{tpu_custom_call.1} parent=5 // pred_check_branch
        %165 = sbr.rel (%p162) target = $region12
      $region11: #{tpu_custom_call.1} parent=5 // pred_region
        %s166 = ssub.s32 %s16, 1
        // Predicated region
        $region13: #{tpu_custom_call.1} parent=11 // pred_check
          %p167 = pneg %p63
        $region14: #{tpu_custom_call.1} parent=11 // pred_check_branch
          %169 = sbr.rel (%p167) target = $region16
        $region15: #{tpu_custom_call.1} parent=11 // pred_region
          %s171 = ssub.s32 1536, 1536
          %172 = vsyncadd [#allocation4], %s171
          %s173 = sshll.u32 [#allocation3], 4
          %s174 = int_to_ptr.vmem [resolvable:$true] %s173
          %179 = dma.hbm_to_vmem [thread:$0]  %s1, 1536, %s174, [#allocation4], 64, 64, 4
        $region16: #{tpu_custom_call.1} parent=11 // pred_fallthru
          _
        // Predicated region
        $region17: #{tpu_custom_call.1} parent=11 // pred_check
          %p180 = pneg %p84
        $region18: #{tpu_custom_call.1} parent=11 // pred_check_branch
          %182 = sbr.rel (%p180) target = $region20
        $region19: #{tpu_custom_call.1} parent=11 // pred_region
          _
        $region20: #{tpu_custom_call.1} parent=11 // pred_fallthru
          _
        // Predicated region
        $region21: #{tpu_custom_call.1} parent=11 // pred_check
          %p183 = pneg %p105
        $region22: #{tpu_custom_call.1} parent=11 // pred_check_branch
          %185 = sbr.rel (%p183) target = $region24
        $region23: #{tpu_custom_call.1} parent=11 // pred_region
          %s187 = ssub.s32 3072, 3072
          %188 = vsyncadd [#allocation7], %s187
          %s189 = sshll.u32 [#allocation6], 4
          %s190 = int_to_ptr.vmem [resolvable:$true] %s189
          %195 = dma.hbm_to_vmem [thread:$0]  %s3, 3072, %s190, [#allocation7], 64, 64, 4
        $region24: #{tpu_custom_call.1} parent=11 // pred_fallthru
          _
        // Predicated region
        $region25: #{tpu_custom_call.1} parent=11 // pred_check
          %p196 = pneg %p126
        $region26: #{tpu_custom_call.1} parent=11 // pred_check_branch
          %198 = sbr.rel (%p196) target = $region28
        $region27: #{tpu_custom_call.1} parent=11 // pred_region
          _
        $region28: #{tpu_custom_call.1} parent=11 // pred_fallthru
          _
      $region12: #{tpu_custom_call.1} parent=5 // pred_fallthru
        _
      %p199 = scmp.lt.s32.totalorder %s16, 2
      // Predicated region
      $region29: #{tpu_custom_call.1} parent=5 // pred_check
        %p200 = pneg %p199
      $region30: #{tpu_custom_call.1} parent=5 // pred_check_branch
        %202 = sbr.rel (%p200) target = $region32
      $region31: #{tpu_custom_call.1} parent=5 // pred_region
        // Predicated region
        $region33: #{tpu_custom_call.1} parent=31 // pred_check
          %p203 = pneg %p36
        $region34: #{tpu_custom_call.1} parent=31 // pred_check_branch
          %205 = sbr.rel (%p203) target = $region36
        $region35: #{tpu_custom_call.1} parent=31 // pred_region
          %p206 = scmp.lt.s32.totalorder %s16, 1
          %s207 = scalar_select %p206, %s16, 1
          %s208 = smul.addr %s207, 3
          %s209 = smul.addr %s208, 8
          %s210 = scalar_lea.vmem %s0, %s209
        $region36: #{tpu_custom_call.1} parent=31 // pred_fallthru
          _
      $region32: #{tpu_custom_call.1} parent=5 // pred_fallthru
        _
      %p211 = scmp.le.s32.totalorder 1, %s16
      %p212 = scmp.lt.s32.totalorder %s16, 3
      %p213 = pnand %p211, %p212
      %p214 = pneg %p213
      // Predicated region
      $region37: #{tpu_custom_call.1} parent=5 // pred_check
        _
      $region38: #{tpu_custom_call.1} parent=5 // pred_check_branch
        %216 = sbr.rel (%p213) target = $region40
      $region39: #{tpu_custom_call.1} parent=5 // pred_region
        %s217 = ssub.s32 %s16, 1
        // Predicated region
        $region41: #{tpu_custom_call.1} parent=39 // pred_check
          %p218 = pneg %p63
        $region42: #{tpu_custom_call.1} parent=39 // pred_check_branch
          %220 = sbr.rel (%p218) target = $region44
        $region43: #{tpu_custom_call.1} parent=39 // pred_region
          %221 = dma.done [#allocation4], 1536
        $region44: #{tpu_custom_call.1} parent=39 // pred_fallthru
          _
        // Predicated region
        $region45: #{tpu_custom_call.1} parent=39 // pred_check
          %p222 = pneg %p105
        $region46: #{tpu_custom_call.1} parent=39 // pred_check_branch
          %224 = sbr.rel (%p222) target = $region48
        $region47: #{tpu_custom_call.1} parent=39 // pred_region
          %225 = dma.done [#allocation7], 3072
        $region48: #{tpu_custom_call.1} parent=39 // pred_fallthru
          _
        %p226 = scmp.lt.s32.totalorder %s21, 1
        %s227 = scalar_select %p226, %s21, 1
        %s228 = smul.addr %s227, 3
        %s229 = smul.addr %s228, 8
        %s230 = scalar_lea.vmem %s0, %s229
        %p231 = pneg %p42
        %p232 = pneg %p39
        %p233 = pneg %p63
        %p234 = pneg %p60
        %p235 = pneg %p84
        %p236 = pneg %p81
        %p237 = pneg %p105
        %p238 = pneg %p102
        %p239 = pneg %p126
        %p240 = pneg %p123
        %p241 = pneg %p152
        %p242 = pneg %p149
        %s243 = sand.u32 %s139, 1
        %s244 = scalar_lea.sflag [#allocation5], %s243
        %s245 = sand.u32 %s139, 1
        %s246 = smul.addr %s245, 16
        %s247 = scalar_lea.vmem [#allocation8], %s246
        %p248 = scmp.lt.s32.totalorder %s21, 1
        %s249 = scalar_select %p248, %s21, 1
        %s250 = smul.addr %s249, 3
        %s251 = smul.addr %s250, 8
        %s252 = scalar_lea.vmem %s0, %s251
        %v254 = vld [vmem:[%s252] sm:$0xff]
        %v255 = vld [vmem:[%s252 + $0x8] sm:$0xff]
        %v256 = vld [vmem:[%s252 + $0x10] sm:$0x3]
        %v257 = vpack.c.bf16 %v255, %v254
        %v258 = vld [vmem:[#allocation3] sm:$0xf]
        %v259 = vld [vmem:[#allocation3 + $0x4] sm:$0xf]
        %v260 = vld [vmem:[#allocation3 + $0x8] sm:$0xf]
        %v261 = vld [vmem:[#allocation3 + $0xc] sm:$0xf]
        %v262 = vld [vmem:[#allocation3 + $0x10] sm:$0xf]
        %v263 = vld [vmem:[#allocation3 + $0x14] sm:$0xf]
        %v264 = vld [vmem:[#allocation3 + $0x18] sm:$0xf]
        %v265 = vld [vmem:[#allocation3 + $0x1c] sm:$0xf]
        %v266 = vpack.c.bf16 %v256, %v256
        %s267 = scalar_lea.vmem [#allocation3], 32
        %v268 = vld [vmem:[%s267] sm:$0xf]
        %v269 = vld [vmem:[%s267 + $0x4] sm:$0xf]
        %v270 = vld [vmem:[%s267 + $0x8] sm:$0xf]
        %v271 = vld [vmem:[%s267 + $0xc] sm:$0xf]
        %v272 = vld [vmem:[%s267 + $0x10] sm:$0xf]
        %v273 = vld [vmem:[%s267 + $0x14] sm:$0xf]
        %v274 = vld [vmem:[%s267 + $0x18] sm:$0xf]
        %v275 = vld [vmem:[%s267 + $0x1c] sm:$0xf]
        %vm276 = vsmask.f32 7424
        %v278 = vshrl.u32 %v257, 16
        %v280 = vshll.u32 %v257, 16
        %v282 = vrot.slane %v280, 1
        %v283 = vor.u32 %v278, %v282
        %v285 = vshll.u32 %v266, 16
        %v287 = vrot.slane %v285, 1
        %v288 = vsel %vm276, %v283, %v287
        %v297 = vunpack.c.l.b16 %v268
        %v298 = vunpack.c.l.b16 %v269
        %v299 = vunpack.c.l.b16 %v270
        %v300 = vunpack.c.l.b16 %v271
        %v301 = vunpack.c.l.b16 %v272
        %v302 = vunpack.c.l.b16 %v273
        %v303 = vunpack.c.l.b16 %v274
        %v304 = vunpack.c.l.b16 %v275
        %v305 = vpack.c.b16 %v298, %v297
        %v306 = vpack.c.b16 %v300, %v299
        %v307 = vpack.c.b16 %v302, %v301
        %v308 = vpack.c.b16 %v304, %v303
        %vm313 = vcmask 523264
        %v315 = vsel %vm313, %v288, 0
        %317 = vmatprep.subr.bf16.mxu0 0
        %318 = vmatpush1.bf16.msra.mxu0 0
        %319 = vmatprep.subr.bf16.mxu0 0
        %320 = vmatpush1.bf16.msra.mxu0 0
        %321 = vmatprep.subr.bf16.mxu0 0
        %322 = vmatpush1.bf16.msra.mxu0 0
        %323 = vmatprep.subr.bf16.mxu0 0
        %324 = vmatpush1.bf16.msra.mxu0 0
        %325 = vmatprep.subr.bf16.mxu0 0
        %326 = vmatpush1.bf16.msra.mxu0 %v308
        %327 = vmatprep.subr.bf16.mxu0 0
        %328 = vmatpush1.bf16.msra.mxu0 %v307
        %329 = vmatprep.subr.bf16.mxu0 0
        %330 = vmatpush1.bf16.msra.mxu0 %v306
        %331 = vmatprep.subr.bf16.mxu0 0
        %332 = vmatpush1.bf16.msra.mxu0 %v305
        %333 = vmatprep.subr.bf16.mxu0 0
        %334 = vmatpush2.bf16.msra.mxu0 0
        %335 = vmatprep.subr.bf16.mxu0 0
        %336 = vmatpush2.bf16.msra.mxu0 0
        %337 = vmatprep.subr.bf16.mxu0 0
        %338 = vmatpush2.bf16.msra.mxu0 0
        %339 = vmatprep.subr.bf16.mxu0 0
        %340 = vmatpush2.bf16.msra.mxu0 0
        %341 = vmatprep.subr.bf16.mxu0 0
        %342 = vmatpush2.bf16.msra.mxu0 0
        %343 = vmatprep.subr.bf16.mxu0 0
        %344 = vmatpush2.bf16.msra.mxu0 0
        %345 = vmatprep.subr.bf16.mxu0 0
        %346 = vmatpush2.bf16.msra.mxu0 0
        %347 = vmatprep.subr.bf16.mxu0 0
        %348 = vmatpush2.bf16.msra.mxu0 0
        %349 = vmatprep.mubr.bf16.mxu0 0
        %350 = vmatmul.mubr.bf16.gmra.mxu0 %v315
        %v351 = vpop.f32.mrf.mxu0
        %v352 = vadd.f32 0.0, %v351
        %v353 = vpop.f32.mrf.mxu0
        %v354 = vpop.f32.mrf.mxu0
        %v355 = vadd.f32 0.0, %v354
        %v356 = vpop.f32.mrf.mxu0
        %357 = vdwg.mxu0
        %v366 = vunpack.c.l.b16 %v258
        %v367 = vunpack.c.l.b16 %v259
        %v368 = vunpack.c.l.b16 %v260
        %v369 = vunpack.c.l.b16 %v261
        %v370 = vunpack.c.l.b16 %v262
        %v371 = vunpack.c.l.b16 %v263
        %v372 = vunpack.c.l.b16 %v264
        %v373 = vunpack.c.l.b16 %v265
        %v374 = vpack.c.b16 %v367, %v366
        %v375 = vpack.c.b16 %v369, %v368
        %v376 = vpack.c.b16 %v371, %v370
        %v377 = vpack.c.b16 %v373, %v372
        %v382 = vsel %vm313, %v257, 0
        %384 = vmatprep.subr.bf16.mxu0 0
        %385 = vmatpush1.bf16.msra.mxu0 0
        %386 = vmatprep.subr.bf16.mxu0 0
        %387 = vmatpush1.bf16.msra.mxu0 0
        %388 = vmatprep.subr.bf16.mxu0 0
        %389 = vmatpush1.bf16.msra.mxu0 0
        %390 = vmatprep.subr.bf16.mxu0 0
        %391 = vmatpush1.bf16.msra.mxu0 0
        %392 = vmatprep.subr.bf16.mxu0 0
        %393 = vmatpush1.bf16.msra.mxu0 %v377
        %394 = vmatprep.subr.bf16.mxu0 0
        %395 = vmatpush1.bf16.msra.mxu0 %v376
        %396 = vmatprep.subr.bf16.mxu0 0
        %397 = vmatpush1.bf16.msra.mxu0 %v375
        %398 = vmatprep.subr.bf16.mxu0 0
        %399 = vmatpush1.bf16.msra.mxu0 %v374
        %400 = vmatprep.subr.bf16.mxu0 0
        %401 = vmatpush2.bf16.msra.mxu0 0
        %402 = vmatprep.subr.bf16.mxu0 0
        %403 = vmatpush2.bf16.msra.mxu0 0
        %404 = vmatprep.subr.bf16.mxu0 0
        %405 = vmatpush2.bf16.msra.mxu0 0
        %406 = vmatprep.subr.bf16.mxu0 0
        %407 = vmatpush2.bf16.msra.mxu0 0
        %408 = vmatprep.subr.bf16.mxu0 0
        %409 = vmatpush2.bf16.msra.mxu0 0
        %410 = vmatprep.subr.bf16.mxu0 0
        %411 = vmatpush2.bf16.msra.mxu0 0
        %412 = vmatprep.subr.bf16.mxu0 0
        %413 = vmatpush2.bf16.msra.mxu0 0
        %414 = vmatprep.subr.bf16.mxu0 0
        %415 = vmatpush2.bf16.msra.mxu0 0
        %416 = vmatprep.mubr.bf16.mxu0 0
        %417 = vmatmul.mubr.bf16.gmra.mxu0 %v382
        %v418 = vpop.f32.mrf.mxu0
        %v419 = vadd.f32 %v352, %v418
        %v420 = vpop.f32.mrf.mxu0
        %v421 = vpop.f32.mrf.mxu0
        %v422 = vadd.f32 %v355, %v421
        %v423 = vpop.f32.mrf.mxu0
        %424 = vdwg.mxu0
        %s425 = scalar_lea.vmem [#allocation3], 64
        %v426 = vld [vmem:[%s425] sm:$0xf]
        %v427 = vld [vmem:[%s425 + $0x4] sm:$0xf]
        %v428 = vld [vmem:[%s425 + $0x8] sm:$0xf]
        %v429 = vld [vmem:[%s425 + $0xc] sm:$0xf]
        %v430 = vld [vmem:[%s425 + $0x10] sm:$0xf]
        %v431 = vld [vmem:[%s425 + $0x14] sm:$0xf]
        %v432 = vld [vmem:[%s425 + $0x18] sm:$0xf]
        %v433 = vld [vmem:[%s425 + $0x1c] sm:$0xf]
        %vm436 = vcmask 1046528
        %v437 = vrot.slane %v257, 1
        %v438 = vrot.slane %v266, 1
        %v439 = vsel %vm436, %v437, %v438
        %v448 = vunpack.c.l.b16 %v426
        %v449 = vunpack.c.l.b16 %v427
        %v450 = vunpack.c.l.b16 %v428
        %v451 = vunpack.c.l.b16 %v429
        %v452 = vunpack.c.l.b16 %v430
        %v453 = vunpack.c.l.b16 %v431
        %v454 = vunpack.c.l.b16 %v432
        %v455 = vunpack.c.l.b16 %v433
        %v456 = vpack.c.b16 %v449, %v448
        %v457 = vpack.c.b16 %v451, %v450
        %v458 = vpack.c.b16 %v453, %v452
        %v459 = vpack.c.b16 %v455, %v454
        %v465 = vsel %vm313, %v439, 0
        %467 = vmatprep.subr.bf16.mxu0 0
        %468 = vmatpush1.bf16.msra.mxu0 0
        %469 = vmatprep.subr.bf16.mxu0 0
        %470 = vmatpush1.bf16.msra.mxu0 0
        %471 = vmatprep.subr.bf16.mxu0 0
        %472 = vmatpush1.bf16.msra.mxu0 0
        %473 = vmatprep.subr.bf16.mxu0 0
        %474 = vmatpush1.bf16.msra.mxu0 0
        %475 = vmatprep.subr.bf16.mxu0 0
        %476 = vmatpush1.bf16.msra.mxu0 %v459
        %477 = vmatprep.subr.bf16.mxu0 0
        %478 = vmatpush1.bf16.msra.mxu0 %v458
        %479 = vmatprep.subr.bf16.mxu0 0
        %480 = vmatpush1.bf16.msra.mxu0 %v457
        %481 = vmatprep.subr.bf16.mxu0 0
        %482 = vmatpush1.bf16.msra.mxu0 %v456
        %483 = vmatprep.subr.bf16.mxu0 0
        %484 = vmatpush2.bf16.msra.mxu0 0
        %485 = vmatprep.subr.bf16.mxu0 0
        %486 = vmatpush2.bf16.msra.mxu0 0
        %487 = vmatprep.subr.bf16.mxu0 0
        %488 = vmatpush2.bf16.msra.mxu0 0
        %489 = vmatprep.subr.bf16.mxu0 0
        %490 = vmatpush2.bf16.msra.mxu0 0
        %491 = vmatprep.subr.bf16.mxu0 0
        %492 = vmatpush2.bf16.msra.mxu0 0
        %493 = vmatprep.subr.bf16.mxu0 0
        %494 = vmatpush2.bf16.msra.mxu0 0
        %495 = vmatprep.subr.bf16.mxu0 0
        %496 = vmatpush2.bf16.msra.mxu0 0
        %497 = vmatprep.subr.bf16.mxu0 0
        %498 = vmatpush2.bf16.msra.mxu0 0
        %499 = vmatprep.mubr.bf16.mxu0 0
        %500 = vmatmul.mubr.bf16.gmra.mxu0 %v465
        %v501 = vpop.f32.mrf.mxu0
        %v502 = vadd.f32 0.0, %v501
        %v503 = vpop.f32.mrf.mxu0
        %v504 = vpop.f32.mrf.mxu0
        %v505 = vadd.f32 0.0, %v504
        %v506 = vpop.f32.mrf.mxu0
        %507 = vdwg.mxu0
        %v508 = vadd.f32 %v419, %v502
        %v509 = vadd.f32 %v422, %v505
        %v510 = vld [vmem:[%s2] sm:$0x1]
        %v512 = vlaneseq
        %v513 = vshrl.u32 %v512, 7
        %v514 = vsub.s32 0, %v513
        %v515 = vrot.slane %v510, %v514
        %v517 = vadd.f32 %v508, %v515
        %v518 = vadd.f32 %v509, %v515
        %v519 = vmax.f32 %v517, 0.0
        %v520 = vmax.f32 %v518, 0.0
        %521 = vst [vmem:[#allocation2] sm:$0x1] 0.0
        %522 = vst [vmem:[#allocation2 + $0x11] sm:$0x1] 0.0
        %523 = vst [vmem:[#allocation2 + $0x1] sm:$0xff] %v519
        %524 = vst [vmem:[#allocation2 + $0x9] sm:$0xff] %v520
        %v525 = vld [vmem:[#allocation2] sm:$0xff]
        %v526 = vld [vmem:[#allocation2 + $0x8] sm:$0xff]
        %v527 = vld [vmem:[#allocation2 + $0x10] sm:$0x3]
        %v528 = vpack.c.bf16 %v526, %v525
        %v529 = vld [vmem:[#allocation6] sm:$0xf]
        %v530 = vld [vmem:[#allocation6 + $0x4] sm:$0xf]
        %v531 = vld [vmem:[#allocation6 + $0x8] sm:$0xf]
        %v532 = vld [vmem:[#allocation6 + $0xc] sm:$0xf]
        %v533 = vld [vmem:[#allocation6 + $0x10] sm:$0xf]
        %v534 = vld [vmem:[#allocation6 + $0x14] sm:$0xf]
        %v535 = vld [vmem:[#allocation6 + $0x18] sm:$0xf]
        %v536 = vld [vmem:[#allocation6 + $0x1c] sm:$0xf]
        %v537 = vld [vmem:[#allocation6 + $0x20] sm:$0xf]
        %v538 = vld [vmem:[#allocation6 + $0x24] sm:$0xf]
        %v539 = vld [vmem:[#allocation6 + $0x28] sm:$0xf]
        %v540 = vld [vmem:[#allocation6 + $0x2c] sm:$0xf]
        %v541 = vld [vmem:[#allocation6 + $0x30] sm:$0xf]
        %v542 = vld [vmem:[#allocation6 + $0x34] sm:$0xf]
        %v543 = vld [vmem:[#allocation6 + $0x38] sm:$0xf]
        %v544 = vld [vmem:[#allocation6 + $0x3c] sm:$0xf]
        %v545 = vpack.c.bf16 %v527, %v527
        %s546 = scalar_lea.vmem [#allocation6], 64
        %v547 = vld [vmem:[%s546] sm:$0xf]
        %v548 = vld [vmem:[%s546 + $0x4] sm:$0xf]
        %v549 = vld [vmem:[%s546 + $0x8] sm:$0xf]
        %v550 = vld [vmem:[%s546 + $0xc] sm:$0xf]
        %v551 = vld [vmem:[%s546 + $0x10] sm:$0xf]
        %v552 = vld [vmem:[%s546 + $0x14] sm:$0xf]
        %v553 = vld [vmem:[%s546 + $0x18] sm:$0xf]
        %v554 = vld [vmem:[%s546 + $0x1c] sm:$0xf]
        %v555 = vld [vmem:[%s546 + $0x20] sm:$0xf]
        %v556 = vld [vmem:[%s546 + $0x24] sm:$0xf]
        %v557 = vld [vmem:[%s546 + $0x28] sm:$0xf]
        %v558 = vld [vmem:[%s546 + $0x2c] sm:$0xf]
        %v559 = vld [vmem:[%s546 + $0x30] sm:$0xf]
        %v560 = vld [vmem:[%s546 + $0x34] sm:$0xf]
        %v561 = vld [vmem:[%s546 + $0x38] sm:$0xf]
        %v562 = vld [vmem:[%s546 + $0x3c] sm:$0xf]
        %v564 = vshrl.u32 %v528, 16
        %v566 = vshll.u32 %v528, 16
        %v568 = vrot.slane %v566, 1
        %v569 = vor.u32 %v564, %v568
        %v571 = vshll.u32 %v545, 16
        %v573 = vrot.slane %v571, 1
        %v574 = vsel %vm276, %v569, %v573
        %v592 = vunpack.c.l.b16 %v547
        %v593 = vunpack.c.l.b16 %v548
        %v594 = vunpack.c.l.b16 %v549
        %v595 = vunpack.c.l.b16 %v550
        %v596 = vunpack.c.l.b16 %v551
        %v597 = vunpack.c.l.b16 %v552
        %v598 = vunpack.c.l.b16 %v553
        %v599 = vunpack.c.l.b16 %v554
        %v600 = vunpack.c.l.b16 %v555
        %v601 = vunpack.c.l.b16 %v556
        %v602 = vunpack.c.l.b16 %v557
        %v603 = vunpack.c.l.b16 %v558
        %v604 = vunpack.c.l.b16 %v559
        %v605 = vunpack.c.l.b16 %v560
        %v606 = vunpack.c.l.b16 %v561
        %v607 = vunpack.c.l.b16 %v562
        %v608 = vpack.c.b16 %v593, %v592
        %v609 = vpack.c.b16 %v595, %v594
        %v610 = vpack.c.b16 %v597, %v596
        %v611 = vpack.c.b16 %v599, %v598
        %v612 = vpack.c.b16 %v601, %v600
        %v613 = vpack.c.b16 %v603, %v602
        %v614 = vpack.c.b16 %v605, %v604
        %v615 = vpack.c.b16 %v607, %v606
        %624 = vmatprep.subr.bf16.mxu0 0
        %625 = vmatpush1.bf16.msra.mxu0 %v615
        %626 = vmatprep.subr.bf16.mxu0 0
        %627 = vmatpush1.bf16.msra.mxu0 %v614
        %628 = vmatprep.subr.bf16.mxu0 0
        %629 = vmatpush1.bf16.msra.mxu0 %v613
        %630 = vmatprep.subr.bf16.mxu0 0
        %631 = vmatpush1.bf16.msra.mxu0 %v612
        %632 = vmatprep.subr.bf16.mxu0 0
        %633 = vmatpush1.bf16.msra.mxu0 %v611
        %634 = vmatprep.subr.bf16.mxu0 0
        %635 = vmatpush1.bf16.msra.mxu0 %v610
        %636 = vmatprep.subr.bf16.mxu0 0
        %637 = vmatpush1.bf16.msra.mxu0 %v609
        %638 = vmatprep.subr.bf16.mxu0 0
        %639 = vmatpush1.bf16.msra.mxu0 %v608
        %640 = vmatprep.subr.bf16.mxu0 0
        %641 = vmatpush2.bf16.msra.mxu0 0
        %642 = vmatprep.subr.bf16.mxu0 0
        %643 = vmatpush2.bf16.msra.mxu0 0
        %644 = vmatprep.subr.bf16.mxu0 0
        %645 = vmatpush2.bf16.msra.mxu0 0
        %646 = vmatprep.subr.bf16.mxu0 0
        %647 = vmatpush2.bf16.msra.mxu0 0
        %648 = vmatprep.subr.bf16.mxu0 0
        %649 = vmatpush2.bf16.msra.mxu0 0
        %650 = vmatprep.subr.bf16.mxu0 0
        %651 = vmatpush2.bf16.msra.mxu0 0
        %652 = vmatprep.subr.bf16.mxu0 0
        %653 = vmatpush2.bf16.msra.mxu0 0
        %654 = vmatprep.subr.bf16.mxu0 0
        %655 = vmatpush2.bf16.msra.mxu0 0
        %656 = vmatprep.mubr.bf16.mxu0 0
        %657 = vmatmul.mubr.bf16.gmra.mxu0 %v574
        %v658 = vpop.f32.mrf.mxu0
        %v659 = vadd.f32 0.0, %v658
        %v660 = vpop.f32.mrf.mxu0
        %v661 = vpop.f32.mrf.mxu0
        %v662 = vadd.f32 0.0, %v661
        %v663 = vpop.f32.mrf.mxu0
        %664 = vdwg.mxu0
        %v681 = vunpack.c.l.b16 %v529
        %v682 = vunpack.c.l.b16 %v530
        %v683 = vunpack.c.l.b16 %v531
        %v684 = vunpack.c.l.b16 %v532
        %v685 = vunpack.c.l.b16 %v533
        %v686 = vunpack.c.l.b16 %v534
        %v687 = vunpack.c.l.b16 %v535
        %v688 = vunpack.c.l.b16 %v536
        %v689 = vunpack.c.l.b16 %v537
        %v690 = vunpack.c.l.b16 %v538
        %v691 = vunpack.c.l.b16 %v539
        %v692 = vunpack.c.l.b16 %v540
        %v693 = vunpack.c.l.b16 %v541
        %v694 = vunpack.c.l.b16 %v542
        %v695 = vunpack.c.l.b16 %v543
        %v696 = vunpack.c.l.b16 %v544
        %v697 = vpack.c.b16 %v682, %v681
        %v698 = vpack.c.b16 %v684, %v683
        %v699 = vpack.c.b16 %v686, %v685
        %v700 = vpack.c.b16 %v688, %v687
        %v701 = vpack.c.b16 %v690, %v689
        %v702 = vpack.c.b16 %v692, %v691
        %v703 = vpack.c.b16 %v694, %v693
        %v704 = vpack.c.b16 %v696, %v695
        %713 = vmatprep.subr.bf16.mxu0 0
        %714 = vmatpush1.bf16.msra.mxu0 %v704
        %715 = vmatprep.subr.bf16.mxu0 0
        %716 = vmatpush1.bf16.msra.mxu0 %v703
        %717 = vmatprep.subr.bf16.mxu0 0
        %718 = vmatpush1.bf16.msra.mxu0 %v702
        %719 = vmatprep.subr.bf16.mxu0 0
        %720 = vmatpush1.bf16.msra.mxu0 %v701
        %721 = vmatprep.subr.bf16.mxu0 0
        %722 = vmatpush1.bf16.msra.mxu0 %v700
        %723 = vmatprep.subr.bf16.mxu0 0
        %724 = vmatpush1.bf16.msra.mxu0 %v699
        %725 = vmatprep.subr.bf16.mxu0 0
        %726 = vmatpush1.bf16.msra.mxu0 %v698
        %727 = vmatprep.subr.bf16.mxu0 0
        %728 = vmatpush1.bf16.msra.mxu0 %v697
        %729 = vmatprep.subr.bf16.mxu0 0
        %730 = vmatpush2.bf16.msra.mxu0 0
        %731 = vmatprep.subr.bf16.mxu0 0
        %732 = vmatpush2.bf16.msra.mxu0 0
        %733 = vmatprep.subr.bf16.mxu0 0
        %734 = vmatpush2.bf16.msra.mxu0 0
        %735 = vmatprep.subr.bf16.mxu0 0
        %736 = vmatpush2.bf16.msra.mxu0 0
        %737 = vmatprep.subr.bf16.mxu0 0
        %738 = vmatpush2.bf16.msra.mxu0 0
        %739 = vmatprep.subr.bf16.mxu0 0
        %740 = vmatpush2.bf16.msra.mxu0 0
        %741 = vmatprep.subr.bf16.mxu0 0
        %742 = vmatpush2.bf16.msra.mxu0 0
        %743 = vmatprep.subr.bf16.mxu0 0
        %744 = vmatpush2.bf16.msra.mxu0 0
        %745 = vmatprep.mubr.bf16.mxu0 0
        %746 = vmatmul.mubr.bf16.gmra.mxu0 %v528
        %v747 = vpop.f32.mrf.mxu0
        %v748 = vadd.f32 %v659, %v747
        %v749 = vpop.f32.mrf.mxu0
        %v750 = vpop.f32.mrf.mxu0
        %v751 = vadd.f32 %v662, %v750
        %v752 = vpop.f32.mrf.mxu0
        %753 = vdwg.mxu0
        %s754 = scalar_lea.vmem [#allocation6], 128
        %v755 = vld [vmem:[%s754] sm:$0xf]
        %v756 = vld [vmem:[%s754 + $0x4] sm:$0xf]
        %v757 = vld [vmem:[%s754 + $0x8] sm:$0xf]
        %v758 = vld [vmem:[%s754 + $0xc] sm:$0xf]
        %v759 = vld [vmem:[%s754 + $0x10] sm:$0xf]
        %v760 = vld [vmem:[%s754 + $0x14] sm:$0xf]
        %v761 = vld [vmem:[%s754 + $0x18] sm:$0xf]
        %v762 = vld [vmem:[%s754 + $0x1c] sm:$0xf]
        %v763 = vld [vmem:[%s754 + $0x20] sm:$0xf]
        %v764 = vld [vmem:[%s754 + $0x24] sm:$0xf]
        %v765 = vld [vmem:[%s754 + $0x28] sm:$0xf]
        %v766 = vld [vmem:[%s754 + $0x2c] sm:$0xf]
        %v767 = vld [vmem:[%s754 + $0x30] sm:$0xf]
        %v768 = vld [vmem:[%s754 + $0x34] sm:$0xf]
        %v769 = vld [vmem:[%s754 + $0x38] sm:$0xf]
        %v770 = vld [vmem:[%s754 + $0x3c] sm:$0xf]
        %v773 = vrot.slane %v528, 1
        %v774 = vrot.slane %v545, 1
        %v775 = vsel %vm436, %v773, %v774
        %v793 = vunpack.c.l.b16 %v755
        %v794 = vunpack.c.l.b16 %v756
        %v795 = vunpack.c.l.b16 %v757
        %v796 = vunpack.c.l.b16 %v758
        %v797 = vunpack.c.l.b16 %v759
        %v798 = vunpack.c.l.b16 %v760
        %v799 = vunpack.c.l.b16 %v761
        %v800 = vunpack.c.l.b16 %v762
        %v801 = vunpack.c.l.b16 %v763
        %v802 = vunpack.c.l.b16 %v764
        %v803 = vunpack.c.l.b16 %v765
        %v804 = vunpack.c.l.b16 %v766
        %v805 = vunpack.c.l.b16 %v767
        %v806 = vunpack.c.l.b16 %v768
        %v807 = vunpack.c.l.b16 %v769
        %v808 = vunpack.c.l.b16 %v770
        %v809 = vpack.c.b16 %v794, %v793
        %v810 = vpack.c.b16 %v796, %v795
        %v811 = vpack.c.b16 %v798, %v797
        %v812 = vpack.c.b16 %v800, %v799
        %v813 = vpack.c.b16 %v802, %v801
        %v814 = vpack.c.b16 %v804, %v803
        %v815 = vpack.c.b16 %v806, %v805
        %v816 = vpack.c.b16 %v808, %v807
        %825 = vmatprep.subr.bf16.mxu0 0
        %826 = vmatpush1.bf16.msra.mxu0 %v816
        %827 = vmatprep.subr.bf16.mxu0 0
        %828 = vmatpush1.bf16.msra.mxu0 %v815
        %829 = vmatprep.subr.bf16.mxu0 0
        %830 = vmatpush1.bf16.msra.mxu0 %v814
        %831 = vmatprep.subr.bf16.mxu0 0
        %832 = vmatpush1.bf16.msra.mxu0 %v813
        %833 = vmatprep.subr.bf16.mxu0 0
        %834 = vmatpush1.bf16.msra.mxu0 %v812
        %835 = vmatprep.subr.bf16.mxu0 0
        %836 = vmatpush1.bf16.msra.mxu0 %v811
        %837 = vmatprep.subr.bf16.mxu0 0
        %838 = vmatpush1.bf16.msra.mxu0 %v810
        %839 = vmatprep.subr.bf16.mxu0 0
        %840 = vmatpush1.bf16.msra.mxu0 %v809
        %841 = vmatprep.subr.bf16.mxu0 0
        %842 = vmatpush2.bf16.msra.mxu0 0
        %843 = vmatprep.subr.bf16.mxu0 0
        %844 = vmatpush2.bf16.msra.mxu0 0
        %845 = vmatprep.subr.bf16.mxu0 0
        %846 = vmatpush2.bf16.msra.mxu0 0
        %847 = vmatprep.subr.bf16.mxu0 0
        %848 = vmatpush2.bf16.msra.mxu0 0
        %849 = vmatprep.subr.bf16.mxu0 0
        %850 = vmatpush2.bf16.msra.mxu0 0
        %851 = vmatprep.subr.bf16.mxu0 0
        %852 = vmatpush2.bf16.msra.mxu0 0
        %853 = vmatprep.subr.bf16.mxu0 0
        %854 = vmatpush2.bf16.msra.mxu0 0
        %855 = vmatprep.subr.bf16.mxu0 0
        %856 = vmatpush2.bf16.msra.mxu0 0
        %857 = vmatprep.mubr.bf16.mxu0 0
        %858 = vmatmul.mubr.bf16.gmra.mxu0 %v775
        %v859 = vpop.f32.mrf.mxu0
        %v860 = vadd.f32 0.0, %v859
        %v861 = vpop.f32.mrf.mxu0
        %v862 = vpop.f32.mrf.mxu0
        %v863 = vadd.f32 0.0, %v862
        %v864 = vpop.f32.mrf.mxu0
        %865 = vdwg.mxu0
        %v866 = vadd.f32 %v748, %v860
        %v867 = vadd.f32 %v751, %v863
        %v868 = vld [vmem:[%s4] sm:$0x1]
        %v870 = vlaneseq
        %v871 = vshrl.u32 %v870, 7
        %v872 = vsub.s32 0, %v871
        %v873 = vrot.slane %v868, %v872
        %v875 = vadd.f32 %v866, %v873
        %v876 = vadd.f32 %v867, %v873
        %v877 = vmax.f32 %v875, 0.0
        %v878 = vmax.f32 %v876, 0.0
        %v879 = vadd.f32 %v519, %v877
        %v880 = vadd.f32 %v520, %v878
        %881 = vst [vmem:[%s247] sm:$0xff] %v879
        %882 = vst [vmem:[%s247 + $0x8] sm:$0xff] %v880
        %s883 = sand.u32 %s139, 1
        %s884 = scalar_lea.sflag [#allocation5], %s883
        %s885 = sand.u32 %s139, 1
        %s886 = smul.addr %s885, 16
        %s887 = scalar_lea.vmem [#allocation8], %s886
        // Predicated region
        $region49: #{tpu_custom_call.1} parent=39 // pred_check
          %p888 = pneg %p149
        $region50: #{tpu_custom_call.1} parent=39 // pred_check_branch
          %890 = sbr.rel (%p888) target = $region52
        $region51: #{tpu_custom_call.1} parent=39 // pred_region
          %s892 = ssub.s32 256, 256
          %893 = vsyncadd %s884, %s892
          %s894 = smul.addr %s21, 2
          %s895 = smul.addr %s894, 128
          %s896 = scalar_lea.hbm %s5, %s895
          %s897 = sshll.u32 %s887, 4
          %s898 = int_to_ptr.vmem [resolvable:$true] %s897
          %903 = dma.vmem_to_hbm [thread:$0]  %s898, 256, %s896, %s884, 128, 128, 8
        $region52: #{tpu_custom_call.1} parent=39 // pred_fallthru
          _
      $region40: #{tpu_custom_call.1} parent=5 // pred_fallthru
        _
      %p904 = scmp.le.s32.totalorder 2, %s16
      // Predicated region
      $region53: #{tpu_custom_call.1} parent=5 // pred_check
        %p905 = pneg %p904
      $region54: #{tpu_custom_call.1} parent=5 // pred_check_branch
        %907 = sbr.rel (%p905) target = $region56
      $region55: #{tpu_custom_call.1} parent=5 // pred_region
        %s908 = ssub.s32 %s16, 2
        // Predicated region
        $region57: #{tpu_custom_call.1} parent=55 // pred_check
          %p909 = pneg %p155
        $region58: #{tpu_custom_call.1} parent=55 // pred_check_branch
          %911 = sbr.rel (%p909) target = $region60
        $region59: #{tpu_custom_call.1} parent=55 // pred_region
          %s912 = sand.u32 %s140, 1
          %s913 = scalar_lea.sflag [#allocation5], %s912
          %s914 = sand.u32 %s140, 1
          %s915 = smul.addr %s914, 16
          %s916 = scalar_lea.vmem [#allocation8], %s915
          %917 = dma.done %s913, 256
        $region60: #{tpu_custom_call.1} parent=55 // pred_fallthru
          _
      $region56: #{tpu_custom_call.1} parent=5 // pred_fallthru
        _
    $region6: #{tpu_custom_call.1} parent=1 // loop_footer
      %s20 = sadd.s32 1, %s16
    $region7: #{tpu_custom_call.1} parent=1 // loop_footer_branch
      %15 = sbr.rel target = $region3
    $region8: #{tpu_custom_call.1} parent=1 // loop_exit
      _
    %918 = vsyncpa [#allocation4], 1
    %s919 = scalar_lea.sflag [#allocation4], 1
    %920 = vsyncpa %s919, 1
    %921 = vsyncpa [#allocation7], 1
    %922 = vsyncpa [#allocation5], 1
    %s923 = scalar_lea.sflag [#allocation5], 1
    %924 = vsyncpa %s923, 1

</llo_original>
